<compile_context>
chip_gen: v5e
topology: v5e:2x2
jax: 0.10.0
libtpu: 0.0.40
codegen_flags: <defaults>
</compile_context>

<pallas_src>
import jax
import jax.numpy as jnp
from jax.experimental import pallas as pl
from jax.experimental.pallas import tpu as pltpu


def _round_up(x, m):
    return (x + m - 1) // m * m


def _pad2d(a, rows, cols):
    return jnp.pad(a, ((0, rows - a.shape[0]), (0, cols - a.shape[1])))


def _lora_linear_kernel(x_ref, w_ref, xa_ref, bmat_ref, bias_ref, o_ref, acc_ref):
    # x_ref:    (tm, tk)    bf16   activation tile
    # w_ref:    (tk, tn)    bf16   base weight tile (pre-transposed to (in, out))
    # xa_ref:   (tm, R)     bf16   precomputed x @ lora_A (rank padded to R)
    # bmat_ref: (R, tn)     bf16   lora_B * (alpha/rank), rank padded to R
    # bias_ref: (1, tn)     f32    base bias tile
    # o_ref:    (tm, tn)    out dtype
    # acc_ref:  (tm, tn)    f32    VMEM accumulator scratch
    k = pl.program_id(2)

    @pl.when(k == 0)
    def _():
        # LoRA + bias folded into the accumulator init: this work hides under
        # the remaining K iterations instead of sitting on the final step's
        # writeback critical path.
        acc_ref[...] = bias_ref[...] + jnp.dot(
            xa_ref[...], bmat_ref[...], preferred_element_type=jnp.float32)

    # Base linear path: accumulate over the K grid axis on the MXU.
    acc_ref[...] += jnp.dot(x_ref[...], w_ref[...],
                            preferred_element_type=jnp.float32)

    @pl.when(k == pl.num_programs(2) - 1)
    def _():
        o_ref[...] = acc_ref[...].astype(o_ref.dtype)


def _linear_bias_kernel(x_ref, w_ref, bias_ref, o_ref, acc_ref):
    # Plain GEMM + bias kernel for the merged-LoRA (serving) path.
    k = pl.program_id(2)

    @pl.when(k == 0)
    def _():
        acc_ref[...] = jnp.broadcast_to(
            bias_ref[...], acc_ref.shape).astype(jnp.float32)

    acc_ref[...] += jnp.dot(x_ref[...], w_ref[...],
                            preferred_element_type=jnp.float32)

    @pl.when(k == pl.num_programs(2) - 1)
    def _():
        o_ref[...] = acc_ref[...].astype(o_ref.dtype)


def lora_linear(x, weight, bias, lora_A, lora_B, *, alpha=32, rank=None,
                tm=512, tn=512, tk=1024, merge_lora=False):
    """x: (..., in_features). weight: (out_features, in_features) like torch.
    lora_A: (in_features, rank). lora_B: (rank, out_features).
    Returns (..., out_features).

    merge_lora=True folds the LoRA delta into the weight in the wrapper and
    runs a plain GEMM+bias kernel (useful for serving with a static adapter;
    the merged bf16 weight should ideally be cached across calls)."""
    if rank is None:
        rank = lora_A.shape[-1]
    scaling = alpha / rank

    in_features = x.shape[-1]
    out_features = weight.shape[0]
    lead_shape = x.shape[:-1]
    out_dtype = x.dtype

    x2d = x.reshape(-1, in_features)
    M = x2d.shape[0]
    # Single bf16 copy of the activations (no intermediate f32 materialization).
    x_bf = x2d.astype(jnp.bfloat16)

    # --- Tile selection: large defaults, clamped to the problem dims so small
    #     shapes still produce valid (8,128)-aligned blocks.
    tm = _round_up(min(tm, max(M, 1)), 16)
    tn = _round_up(min(tn, out_features), 128)
    tk = _round_up(min(tk, in_features), 128)

    M_pad = _round_up(M, tm)
    N_pad = _round_up(out_features, tn)

    # v7x megacore guard: two TensorCores shard the "parallel" grid axes; a
    # (1, 1, K) grid would leave one core idle.  Prefer splitting N, else M.
    if M_pad // tm == 1 and N_pad // tn == 1:
        tn_half = _round_up(tn // 2, 128)
        tm_half = _round_up(tm // 2, 16)
        if tn_half < tn:
            tn = tn_half
            N_pad = _round_up(out_features, tn)
        elif tm_half < tm:
            tm = tm_half
            M_pad = _round_up(M, tm)

    K_pad = _round_up(in_features, tk)
    R_pad = _round_up(rank, 128)   # keep the rank axis MXU/lane aligned

    # --- Operands (bf16 MXU inputs, f32 accumulation inside the kernel).
    #     Zero padding is exact for the matmuls; padded rows/cols are sliced
    #     off afterwards.
    x_p = _pad2d(x_bf, M_pad, K_pad)
    bias_p = _pad2d(bias.astype(jnp.float32).reshape(1, out_features), 1, N_pad)

    if merge_lora:
        # Serving path: fold the LoRA delta into the (in, out) weight once.
        delta = (lora_A.astype(jnp.float32) @ lora_B.astype(jnp.float32)) * scaling
        w_p = _pad2d((weight.astype(jnp.float32).T + delta).astype(jnp.bfloat16),
                     K_pad, N_pad)
        xa_p = bm_p = None
    else:
        # Cast to bf16 BEFORE transposing: halves the un-hidden transpose
        # traffic vs. transposing the f32 weight.  (For repeated forwards the
        # caller should cache this (in, out) bf16 weight outside the hot path.)
        w_p = _pad2d(weight.astype(jnp.bfloat16).T, K_pad, N_pad)
        # Hoisted rank-r down-projection on the bf16 MXU path (f32 accumulate),
        # independent of the output tile so it is computed once per call.
        xa = jnp.dot(x_bf, lora_A.astype(jnp.bfloat16),
                     preferred_element_type=jnp.float32)
        xa_p = _pad2d(xa.astype(jnp.bfloat16), M_pad, R_pad)
        bm_p = _pad2d((lora_B.astype(jnp.float32) * scaling).astype(jnp.bfloat16),
                      R_pad, N_pad)

    grid = (M_pad // tm, N_pad // tn, K_pad // tk)
    n_i, n_j = grid[0], grid[1]
    out_itemsize = jnp.dtype(out_dtype).itemsize

    # --- Explicit VMEM budget: double buffers for every streamed tile plus
    #     the f32 accumulator, with headroom; capped at 48 MiB so the same
    #     config stays legal on v7x's 64 MiB-per-TensorCore VMEM.
    bytes_in = 2 * (tm * tk + tk * tn) * 2          # x & W tiles, bf16, 2 bufs
    bytes_in += 2 * tn * 4                          # bias tile (f32)
    if not merge_lora:
        bytes_in += 2 * (tm * R_pad + R_pad * tn) * 2
    bytes_out = 2 * tm * tn * out_itemsize
    acc_bytes = tm * tn * 4
    vmem_limit_bytes = int(min(
        48 * 1024 * 1024,
        (bytes_in + bytes_out + acc_bytes) * 1.25 + (4 << 20)))

    # --- Cost estimate reflecting actual re-streaming under this grid:
    #     W is read once per M tile, X once per N tile.
    lora_flops = 0 if merge_lora else 2 * M_pad * R_pad * N_pad
    lora_bytes = 0 if merge_lora else (xa_p.size * 2 + bm_p.size * 2 * n_i)
    cost = pl.CostEstimate(
        flops=2 * M_pad * K_pad * N_pad + lora_flops,
        transcendentals=0,
        bytes_accessed=(x_p.size * 2 * n_j
                        + w_p.size * 2 * n_i
                        + lora_bytes
                        + bias_p.size * 4 * n_i
                        + M_pad * N_pad * out_itemsize),
    )

    if merge_lora:
        kernel = _linear_bias_kernel
        in_specs = [
            pl.BlockSpec((tm, tk), lambda i, j, k: (i, k)),      # x
            pl.BlockSpec((tk, tn), lambda i, j, k: (k, j)),      # W.T (+ delta)
            pl.BlockSpec((1, tn), lambda i, j, k: (0, j)),       # bias
        ]
        args = (x_p, w_p, bias_p)
    else:
        kernel = _lora_linear_kernel
        in_specs = [
            pl.BlockSpec((tm, tk), lambda i, j, k: (i, k)),      # x
            pl.BlockSpec((tk, tn), lambda i, j, k: (k, j)),      # W.T
            pl.BlockSpec((tm, R_pad), lambda i, j, k: (i, 0)),   # x @ A
            pl.BlockSpec((R_pad, tn), lambda i, j, k: (0, j)),   # B * scale
            pl.BlockSpec((1, tn), lambda i, j, k: (0, j)),       # bias
        ]
        args = (x_p, w_p, xa_p, bm_p, bias_p)

    out_p = pl.pallas_call(
        kernel,
        out_shape=jax.ShapeDtypeStruct((M_pad, N_pad), out_dtype),
        grid_spec=pltpu.PrefetchScalarGridSpec(
            num_scalar_prefetch=0,
            grid=grid,
            in_specs=in_specs,
            out_specs=pl.BlockSpec((tm, tn), lambda i, j, k: (i, j)),
            scratch_shapes=[pltpu.VMEM((tm, tn), jnp.float32)],
        ),
        compiler_params=pltpu.CompilerParams(
            dimension_semantics=("parallel", "parallel", "arbitrary"),
            vmem_limit_bytes=vmem_limit_bytes),
        cost_estimate=cost,
    )(*args)

    out2d = out_p[:M, :out_features]
    return out2d.reshape(*lead_shape, out_features)


if __name__ == "__main__":
    key = jax.random.PRNGKey(0)
    k_x, k_w, k_b, k_a, k_bb = jax.random.split(key, 5)

    batch, seq = 2, 8
    in_features, out_features = 256, 256
    rank, alpha = 4, 32

    x = jax.random.normal(k_x, (batch, seq, in_features), dtype=jnp.float32)

    # Deterministic "kaiming-uniform"-style init for the base weight and lora_A.
    bound_w = (6.0 / in_features) ** 0.5
    weight = jax.random.uniform(k_w, (out_features, in_features),
                                minval=-bound_w, maxval=bound_w,
                                dtype=jnp.float32)
    bias = jax.random.uniform(k_b, (out_features,),
                              minval=-1.0 / (in_features ** 0.5),
                              maxval=1.0 / (in_features ** 0.5),
                              dtype=jnp.float32)
    lora_A = jax.random.uniform(k_a, (in_features, rank),
                                minval=-bound_w, maxval=bound_w,
                                dtype=jnp.float32)
    # PyTorch inits lora_B to zeros; use small random values here so the LoRA
    # path is actually exercised numerically (forward semantics identical).
    lora_B = 0.01 * jax.random.normal(k_bb, (rank, out_features),
                                      dtype=jnp.float32)

    # Pure-JAX f32 reference; kernel uses bf16 MXU inputs with f32
    # accumulation, so compare at bf16-level tolerance.
    ref = (x @ weight.T + bias) + (x @ lora_A @ lora_B) * (alpha / rank)

    # 1) Explicit small tiles -> (1, 2, 2) grid: exercises K accumulation,
    #    N tiling, and both pl.when branches (k==0 LoRA+bias init, k==last store).
    out_small = lora_linear(x, weight, bias, lora_A, lora_B,
                            alpha=alpha, rank=rank, tm=16, tn=128, tk=128)
    out_small = jax.block_until_ready(out_small)
    assert out_small.shape == (batch, seq, out_features)
    assert jnp.allclose(out_small, ref, atol=5e-2, rtol=5e-2), float(
        jnp.max(jnp.abs(out_small - ref)))

    # 2) Default (large) tiles: clamp logic + degenerate-grid guard kick in.
    out_default = lora_linear(x, weight, bias, lora_A, lora_B,
                              alpha=alpha, rank=rank)
    out_default = jax.block_until_ready(out_default)
    assert jnp.allclose(out_default, ref, atol=5e-2, rtol=5e-2), float(
        jnp.max(jnp.abs(out_default - ref)))

    # 3) Serving path: LoRA delta merged into the weight (plain GEMM + bias).
    out_merged = lora_linear(x, weight, bias, lora_A, lora_B,
                             alpha=alpha, rank=rank, merge_lora=True)
    out_merged = jax.block_until_ready(out_merged)
    assert jnp.allclose(out_merged, ref, atol=5e-2, rtol=5e-2), float(
        jnp.max(jnp.abs(out_merged - ref)))

    print("KERNEL_OK")
</pallas_src>

<mosaic_0001>
module attributes {stable_mosaic.version = 11 : i64} {
  func.func @_lora_linear_kernel(%arg0: i32, %arg1: i32, %arg2: i32, %arg3: memref<16x128xbf16, #tpu.memory_space<vmem>>, %arg4: memref<128x128xbf16, #tpu.memory_space<vmem>>, %arg5: memref<16x128xbf16, #tpu.memory_space<vmem>>, %arg6: memref<128x128xbf16, #tpu.memory_space<vmem>>, %arg7: memref<1x128xf32, #tpu.memory_space<vmem>>, %arg8: memref<16x128xf32, #tpu.memory_space<vmem>>, %arg9: memref<16x128xf32, #tpu.memory_space<vmem>>) attributes {dimension_semantics = [#tpu.dimension_semantics<parallel>, #tpu.dimension_semantics<parallel>, #tpu.dimension_semantics<arbitrary>], iteration_bounds = array<i64: 1, 2, 2>, scalar_prefetch = 0 : i64, scratch_operands = 1 : i64, tpu.core_type = #tpu.core_type<tc>, window_params = [{transform_indices = @transform_0, window_bounds = array<i64: 16, 128>}, {transform_indices = @transform_1, window_bounds = array<i64: 128, 128>}, {transform_indices = @transform_2, window_bounds = array<i64: 16, 128>}, {transform_indices = @transform_3, window_bounds = array<i64: 128, 128>}, {transform_indices = @transform_4, window_bounds = array<i64: 1, 128>}, {transform_indices = @transform_5, window_bounds = array<i64: 16, 128>}]} {
    %c0_i32 = arith.constant 0 : i32
    %0 = arith.cmpi eq, %arg2, %c0_i32 : i32
    %1 = arith.extui %0 : i1 to i32
    %c0_i32_0 = arith.constant 0 : i32
    %2 = arith.cmpi ne, %1, %c0_i32_0 : i32
    scf.if %2 {
      %c0_9 = arith.constant 0 : index
      %c0_10 = arith.constant 0 : index
      %12 = vector.load %arg7[%c0_9, %c0_10] : memref<1x128xf32, #tpu.memory_space<vmem>>, vector<1x128xf32>
      %c0_11 = arith.constant 0 : index
      %c0_12 = arith.constant 0 : index
      %13 = vector.load %arg5[%c0_11, %c0_12] : memref<16x128xbf16, #tpu.memory_space<vmem>>, vector<16x128xbf16>
      %c0_13 = arith.constant 0 : index
      %c0_14 = arith.constant 0 : index
      %14 = vector.load %arg6[%c0_13, %c0_14] : memref<128x128xbf16, #tpu.memory_space<vmem>>, vector<128x128xbf16>
      %cst_15 = arith.constant dense<0.000000e+00> : vector<16x128xf32>
      %15 = tpu.matmul %13, %14, %cst_15 {dimension_numbers = #tpu.dot_dimension_numbers<[1], [0], [0], [1], [0, 0, 1, 1], [], []>} : vector<16x128xbf16>, vector<128x128xbf16>, vector<16x128xf32> -> vector<16x128xf32>
      %16 = vector.broadcast %12 : vector<1x128xf32> to vector<16x128xf32>
      %17 = arith.addf %16, %15 : vector<16x128xf32>
      %c0_16 = arith.constant 0 : index
      %c0_17 = arith.constant 0 : index
      %18 = vector.load %arg9[%c0_16, %c0_17] : memref<16x128xf32, #tpu.memory_space<vmem>>, vector<16x128xf32>
      tpu.vector_store %arg9[%c0_16, %c0_17], %17 {strides = array<i32>} : memref<16x128xf32, #tpu.memory_space<vmem>>, vector<16x128xf32>,
    } else {
    }
    %c0 = arith.constant 0 : index
    %c0_1 = arith.constant 0 : index
    %3 = vector.load %arg9[%c0, %c0_1] : memref<16x128xf32, #tpu.memory_space<vmem>>, vector<16x128xf32>
    %c0_2 = arith.constant 0 : index
    %c0_3 = arith.constant 0 : index
    %4 = vector.load %arg3[%c0_2, %c0_3] : memref<16x128xbf16, #tpu.memory_space<vmem>>, vector<16x128xbf16>
    %c0_4 = arith.constant 0 : index
    %c0_5 = arith.constant 0 : index
    %5 = vector.load %arg4[%c0_4, %c0_5] : memref<128x128xbf16, #tpu.memory_space<vmem>>, vector<128x128xbf16>
    %cst = arith.constant dense<0.000000e+00> : vector<16x128xf32>
    %6 = tpu.matmul %4, %5, %cst {dimension_numbers = #tpu.dot_dimension_numbers<[1], [0], [0], [1], [0, 0, 1, 1], [], []>} : vector<16x128xbf16>, vector<128x128xbf16>, vector<16x128xf32> -> vector<16x128xf32>
    %7 = arith.addf %3, %6 : vector<16x128xf32>
    %c0_6 = arith.constant 0 : index
    %c0_7 = arith.constant 0 : index
    %8 = vector.load %arg9[%c0_6, %c0_7] : memref<16x128xf32, #tpu.memory_space<vmem>>, vector<16x128xf32>
    tpu.vector_store %arg9[%c0_6, %c0_7], %7 {strides = array<i32>} : memref<16x128xf32, #tpu.memory_space<vmem>>, vector<16x128xf32>,
    %c1_i32 = arith.constant 1 : i32
    %9 = arith.cmpi eq, %arg2, %c1_i32 : i32
    %10 = arith.extui %9 : i1 to i32
    %c0_i32_8 = arith.constant 0 : i32
    %11 = arith.cmpi ne, %10, %c0_i32_8 : i32
    scf.if %11 {
      %c0_9 = arith.constant 0 : index
      %c0_10 = arith.constant 0 : index
      %12 = vector.load %arg9[%c0_9, %c0_10] : memref<16x128xf32, #tpu.memory_space<vmem>>, vector<16x128xf32>
      %c0_11 = arith.constant 0 : index
      %c0_12 = arith.constant 0 : index
      %13 = vector.load %arg8[%c0_11, %c0_12] : memref<16x128xf32, #tpu.memory_space<vmem>>, vector<16x128xf32>
      tpu.vector_store %arg8[%c0_11, %c0_12], %12 {strides = array<i32>} : memref<16x128xf32, #tpu.memory_space<vmem>>, vector<16x128xf32>,
    } else {
    }
    return
  }
  func.func @transform_0(%arg0: i32, %arg1: i32, %arg2: i32) -> (i32, i32) {
    %c0_i32 = arith.constant 0 : i32
    return %arg0, %arg2 : i32, i32
  }
  func.func @transform_1(%arg0: i32, %arg1: i32, %arg2: i32) -> (i32, i32) {
    %c0_i32 = arith.constant 0 : i32
    return %arg2, %arg1 : i32, i32
  }
  func.func @transform_2(%arg0: i32, %arg1: i32, %arg2: i32) -> (i32, i32) {
    %c0_i32 = arith.constant 0 : i32
    %c0_i32_0 = arith.constant 0 : i32
    return %arg0, %c0_i32 : i32, i32
  }
  func.func @transform_3(%arg0: i32, %arg1: i32, %arg2: i32) -> (i32, i32) {
    %c0_i32 = arith.constant 0 : i32
    %c0_i32_0 = arith.constant 0 : i32
    return %c0_i32, %arg1 : i32, i32
  }
  func.func @transform_4(%arg0: i32, %arg1: i32, %arg2: i32) -> (i32, i32) {
    %c0_i32 = arith.constant 0 : i32
    %c0_i32_0 = arith.constant 0 : i32
    return %c0_i32, %arg1 : i32, i32
  }
  func.func @transform_5(%arg0: i32, %arg1: i32, %arg2: i32) -> (i32, i32) {
    %c0_i32 = arith.constant 0 : i32
    return %arg0, %arg1 : i32, i32
  }
}

</mosaic_0001>

<llo_original>
// kernel: tpu_custom_call.1
$region0: #{tpu_custom_call.1}
  #allocation0 [shape = 'u32[]', space=smem, size = 0x4, offset = 0x4, fixed_abs, tag = 'smem constant byte address 0x4 - core index']
  #allocation1 [shape = 'u32[72,128]{1,0:T(1,128)}', space=vmem, size = 0x9000, scoped, tag = 'internal scratch']
  #allocation2 [shape = 'f32[16,128]{1,0:T(8,128)}', space=vmem, size = 0x2000, scoped, tag = 'scratch operand']
  %s0 = inlined_call_operand.hbm [shape: bf16[16,256], index: 0, kind: input, shape index: {}]
  %s1 = inlined_call_operand.hbm [shape: bf16[256,256], index: 1, kind: input, shape index: {}]
  %s2 = inlined_call_operand.hbm [shape: bf16[16,128], index: 2, kind: input, shape index: {}]
  %s3 = inlined_call_operand.hbm [shape: bf16[128,256], index: 3, kind: input, shape index: {}]
  %s4 = inlined_call_operand.vmem [shape: f32[1,256], index: 4, kind: input, shape index: {}]
  %s5 = inlined_call_operand.hbm [shape: f32[16,256], index: 5, kind: output, shape index: {}]
  %s6 = sld [smem:[#allocation0]]
  $region77: #{tpu_custom_call.1} parent=0
    _
  %s8 = ssub.s32 1, %s6
  %s9 = scalar_select 0, %s8, %s6
  $region1: #{tpu_custom_call.1} parent=0
    #allocation3 [shape = 'u8[8192]{0}', space=vmem, size = 0x2000, scoped, tag = 'input window, operand 0']
    #allocation4 [shape = 's32[2]{0}', space=sflag, size = 0x8, scoped, tag = 'scoped memory for tpu_custom_call.1']
    #allocation5 [shape = 's32[2]{0}', space=sflag, size = 0x8, scoped, tag = 'scoped memory for tpu_custom_call.1']
    #allocation6 [shape = 'u8[65536]{0}', space=vmem, size = 0x10000, scoped, tag = 'input window, operand 1']
    #allocation7 [shape = 's32[2]{0}', space=sflag, size = 0x8, scoped, tag = 'scoped memory for tpu_custom_call.1']
    #allocation8 [shape = 'u8[4096]{0}', space=vmem, size = 0x1000, scoped, tag = 'input window, operand 2, single buffered']
    #allocation9 [shape = 'u8[65536]{0}', space=vmem, size = 0x10000, scoped, tag = 'input window, operand 3']
    #allocation10 [shape = 's32[2]{0}', space=sflag, size = 0x8, scoped, tag = 'scoped memory for tpu_custom_call.1']
    #allocation11 [shape = 'u8[16384]{0}', space=vmem, size = 0x4000, scoped, tag = 'output window, operand 0']
    %10 = vsyncpa [#allocation4], 0
    %s11 = scalar_lea.sflag [#allocation4], 1
    %12 = vsyncpa %s11, 0
    %13 = vsyncpa [#allocation7], 0
    %s14 = scalar_lea.sflag [#allocation7], 1
    %15 = vsyncpa %s14, 0
    %16 = vsyncpa [#allocation10], 0
    %s17 = scalar_lea.sflag [#allocation10], 1
    %18 = vsyncpa %s17, 0
    %19 = vsyncpa [#allocation5], 0
    %s20 = scalar_lea.sflag [#allocation5], 1
    %21 = vsyncpa %s20, 0
    loop: start=0, step=1, limit=6
    $region2: #{tpu_custom_call.1} parent=1 // loop_pre_header
      _
    $region3: #{tpu_custom_call.1} parent=1 // loop_header
      %s23 = sphi 0, %s27
      %p24 = scmp.ge.s32.totalorder %s23, 6
      %s30 = sphi 0, %s49
      %s31 = sphi 0, %s45
      %s32 = sphi 0, %s41
      %s33 = sphi 0, %s30
      %s34 = sphi 0, %s31
      %s35 = sphi 0, %s32
      %s36 = sphi 0, %s33
      %s37 = sphi 0, %s34
      %s38 = sphi 0, %s35
      %s54 = sphi 0, %s56
      %s57 = sphi 0, %s54
      %s58 = sphi 0, %s57
      %s74 = sphi 0, %s58
      %s82 = sphi 0, %s84
      %s85 = sphi 0, %s82
      %s86 = sphi 0, %s85
      %s102 = sphi 0, %s86
      %s108 = sphi 0, %s110
      %s111 = sphi 0, %s108
      %s112 = sphi 0, %s111
      %s128 = sphi 0, %s112
      %s134 = sphi 0, %s136
      %s137 = sphi 0, %s134
      %s138 = sphi 0, %s137
      %s154 = sphi 0, %s138
      %s160 = sphi 0, %s162
      %s163 = sphi 0, %s160
      %s164 = sphi 0, %s163
      %s180 = sphi 0, %s164
      %s188 = sphi 0, %s190
      %s191 = sphi 0, %s188
      %s192 = sphi 0, %s191
      %s208 = sphi 0, %s192
    $region4: #{tpu_custom_call.1} parent=1 // loop_header_branch
      %26 = sbr.rel (%p24) target = $region8
    $region5: #{tpu_custom_call.1} parent=1 // loop_body
      %s28 = ssub.s32 %s23, 1
      %s29 = ssub.s32 %s23, 2
      %s39 = sadd.s32 1, %s32
      %p40 = scmp.ge.s32.totalorder %s39, 2
      %s41 = scalar_select %p40, 0, %s39
      %s42 = sadd.s32 1, %s31
      %s43 = scalar_select %p40, %s42, %s31
      %p44 = scmp.ge.s32.totalorder %s43, 2
      %s45 = scalar_select %p44, 0, %s43
      %s46 = sadd.s32 1, %s30
      %s47 = scalar_select %p44, %s46, %s30
      %p48 = scmp.ge.s32.totalorder %s47, 1
      %s49 = scalar_select %p48, 0, %s47
      %s50 = ssub.s32 %s30, %s49
      %s51 = ssub.s32 %s32, %s41
      %s52 = sor.u32 %s50, %s51
      %p53 = scmp.eq.s32.totalorder %s52, 0
      %s55 = sadd.s32 %s54, 1
      %s56 = scalar_select %p53, %s54, %s55
      %p59 = pneg %p53
      %p60 = scmp.eq.s32.totalorder %s23, 3
      %p61 = por %p59, %p60
      %p62 = scmp.ne.s32.totalorder %s54, %s57
      %p63 = scmp.eq.s32.totalorder %s23, 0
      %p64 = por %p62, %p63
      %p65 = scmp.ne.s32.totalorder %s54, %s57
      %p66 = scmp.eq.s32.totalorder %s28, 3
      %p67 = por %p65, %p66
      %p68 = scmp.ne.s32.totalorder %s57, %s58
      %p69 = scmp.eq.s32.totalorder %s28, 0
      %p70 = por %p68, %p69
      %p71 = scmp.ne.s32.totalorder %s57, %s58
      %p72 = scmp.eq.s32.totalorder %s29, 3
      %p73 = por %p71, %p72
      %p75 = scmp.ne.s32.totalorder %s58, %s74
      %p76 = scmp.eq.s32.totalorder %s29, 0
      %p77 = por %p75, %p76
      %s78 = ssub.s32 %s32, %s41
      %s79 = ssub.s32 %s31, %s45
      %s80 = sor.u32 %s78, %s79
      %p81 = scmp.eq.s32.totalorder %s80, 0
      %s83 = sadd.s32 %s82, 1
      %s84 = scalar_select %p81, %s82, %s83
      %p87 = pneg %p81
      %p88 = scmp.eq.s32.totalorder %s23, 3
      %p89 = por %p87, %p88
      %p90 = scmp.ne.s32.totalorder %s82, %s85
      %p91 = scmp.eq.s32.totalorder %s23, 0
      %p92 = por %p90, %p91
      %p93 = scmp.ne.s32.totalorder %s82, %s85
      %p94 = scmp.eq.s32.totalorder %s28, 3
      %p95 = por %p93, %p94
      %p96 = scmp.ne.s32.totalorder %s85, %s86
      %p97 = scmp.eq.s32.totalorder %s28, 0
      %p98 = por %p96, %p97
      %p99 = scmp.ne.s32.totalorder %s85, %s86
      %p100 = scmp.eq.s32.totalorder %s29, 3
      %p101 = por %p99, %p100
      %p103 = scmp.ne.s32.totalorder %s86, %s102
      %p104 = scmp.eq.s32.totalorder %s29, 0
      %p105 = por %p103, %p104
      %s106 = ssub.s32 %s30, %s49
      %p107 = scmp.eq.s32.totalorder %s106, 0
      %s109 = sadd.s32 %s108, 1
      %s110 = scalar_select %p107, %s108, %s109
      %p113 = pneg %p107
      %p114 = scmp.eq.s32.totalorder %s23, 3
      %p115 = por %p113, %p114
      %p116 = scmp.ne.s32.totalorder %s108, %s111
      %p117 = scmp.eq.s32.totalorder %s23, 0
      %p118 = por %p116, %p117
      %p119 = scmp.ne.s32.totalorder %s108, %s111
      %p120 = scmp.eq.s32.totalorder %s28, 3
      %p121 = por %p119, %p120
      %p122 = scmp.ne.s32.totalorder %s111, %s112
      %p123 = scmp.eq.s32.totalorder %s28, 0
      %p124 = por %p122, %p123
      %p125 = scmp.ne.s32.totalorder %s111, %s112
      %p126 = scmp.eq.s32.totalorder %s29, 3
      %p127 = por %p125, %p126
      %p129 = scmp.ne.s32.totalorder %s112, %s128
      %p130 = scmp.eq.s32.totalorder %s29, 0
      %p131 = por %p129, %p130
      %s132 = ssub.s32 %s31, %s45
      %p133 = scmp.eq.s32.totalorder %s132, 0
      %s135 = sadd.s32 %s134, 1
      %s136 = scalar_select %p133, %s134, %s135
      %p139 = pneg %p133
      %p140 = scmp.eq.s32.totalorder %s23, 3
      %p141 = por %p139, %p140
      %p142 = scmp.ne.s32.totalorder %s134, %s137
      %p143 = scmp.eq.s32.totalorder %s23, 0
      %p144 = por %p142, %p143
      %p145 = scmp.ne.s32.totalorder %s134, %s137
      %p146 = scmp.eq.s32.totalorder %s28, 3
      %p147 = por %p145, %p146
      %p148 = scmp.ne.s32.totalorder %s137, %s138
      %p149 = scmp.eq.s32.totalorder %s28, 0
      %p150 = por %p148, %p149
      %p151 = scmp.ne.s32.totalorder %s137, %s138
      %p152 = scmp.eq.s32.totalorder %s29, 3
      %p153 = por %p151, %p152
      %p155 = scmp.ne.s32.totalorder %s138, %s154
      %p156 = scmp.eq.s32.totalorder %s29, 0
      %p157 = por %p155, %p156
      %s158 = ssub.s32 %s31, %s45
      %p159 = scmp.eq.s32.totalorder %s158, 0
      %s161 = sadd.s32 %s160, 1
      %s162 = scalar_select %p159, %s160, %s161
      %p165 = pneg %p159
      %p166 = scmp.eq.s32.totalorder %s23, 3
      %p167 = por %p165, %p166
      %p168 = scmp.ne.s32.totalorder %s160, %s163
      %p169 = scmp.eq.s32.totalorder %s23, 0
      %p170 = por %p168, %p169
      %p171 = scmp.ne.s32.totalorder %s160, %s163
      %p172 = scmp.eq.s32.totalorder %s28, 3
      %p173 = por %p171, %p172
      %p174 = scmp.ne.s32.totalorder %s163, %s164
      %p175 = scmp.eq.s32.totalorder %s28, 0
      %p176 = por %p174, %p175
      %p177 = scmp.ne.s32.totalorder %s163, %s164
      %p178 = scmp.eq.s32.totalorder %s29, 3
      %p179 = por %p177, %p178
      %p181 = scmp.ne.s32.totalorder %s164, %s180
      %p182 = scmp.eq.s32.totalorder %s29, 0
      %p183 = por %p181, %p182
      %s184 = ssub.s32 %s30, %s49
      %s185 = ssub.s32 %s31, %s45
      %s186 = sor.u32 %s184, %s185
      %p187 = scmp.eq.s32.totalorder %s186, 0
      %s189 = sadd.s32 %s188, 1
      %s190 = scalar_select %p187, %s188, %s189
      %p193 = pneg %p187
      %p194 = scmp.eq.s32.totalorder %s23, 3
      %p195 = por %p193, %p194
      %p196 = scmp.ne.s32.totalorder %s188, %s191
      %p197 = scmp.eq.s32.totalorder %s23, 0
      %p198 = por %p196, %p197
      %p199 = scmp.ne.s32.totalorder %s188, %s191
      %p200 = scmp.eq.s32.totalorder %s28, 3
      %p201 = por %p199, %p200
      %p202 = scmp.ne.s32.totalorder %s191, %s192
      %p203 = scmp.eq.s32.totalorder %s28, 0
      %p204 = por %p202, %p203
      %p205 = scmp.ne.s32.totalorder %s191, %s192
      %p206 = scmp.eq.s32.totalorder %s29, 3
      %p207 = por %p205, %p206
      %p209 = scmp.ne.s32.totalorder %s192, %s208
      %p210 = scmp.eq.s32.totalorder %s29, 0
      %p211 = por %p209, %p210
      %p212 = scmp.le.s32.totalorder 1, %s23
      %p213 = scmp.lt.s32.totalorder %s23, 5
      %p214 = pnand %p212, %p213
      %p215 = pneg %p214
      // Predicated region
      $region9: #{tpu_custom_call.1} parent=5 // pred_check
        _
      $region10: #{tpu_custom_call.1} parent=5 // pred_check_branch
        %217 = sbr.rel (%p214) target = $region12
      $region11: #{tpu_custom_call.1} parent=5 // pred_region
        %s218 = ssub.s32 %s23, 1
        // Predicated region
        $region13: #{tpu_custom_call.1} parent=11 // pred_check
          %p219 = pneg %p124
        $region14: #{tpu_custom_call.1} parent=11 // pred_check_branch
          %221 = sbr.rel (%p219) target = $region16
        $region15: #{tpu_custom_call.1} parent=11 // pred_region
          %s222 = smul.u32 2, %s33
          %224 = vsyncadd [#allocation7], 0
          %s225 = smul.addr %s222, 4
          %s226 = scalar_lea.hbm %s2, %s225
          %s227 = sshll.u32 %s226, 4
          %s228 = int_to_ptr.hbm [resolvable:$true] %s227
          %s229 = sshll.u32 [#allocation8], 4
          %s230 = int_to_ptr.vmem [resolvable:$true] %s229
          %235 = dma.hbm_to_vmem [thread:$0]  %s228, 128, %s230, [#allocation7], 64, 64, 4
        $region16: #{tpu_custom_call.1} parent=11 // pred_fallthru
          _
      $region12: #{tpu_custom_call.1} parent=5 // pred_fallthru
        _
      %p236 = scmp.lt.s32.totalorder %s23, 4
      // Predicated region
      $region17: #{tpu_custom_call.1} parent=5 // pred_check
        %p237 = pneg %p236
      $region18: #{tpu_custom_call.1} parent=5 // pred_check_branch
        %239 = sbr.rel (%p237) target = $region20
      $region19: #{tpu_custom_call.1} parent=5 // pred_region
        // Predicated region
        $region21: #{tpu_custom_call.1} parent=19 // pred_check
          %p240 = pneg %p64
        $region22: #{tpu_custom_call.1} parent=19 // pred_check_branch
          %242 = sbr.rel (%p240) target = $region24
        $region23: #{tpu_custom_call.1} parent=19 // pred_region
          %s243 = sand.u32 %s54, 1
          %s244 = scalar_lea.sflag [#allocation4], %s243
          %s245 = sand.u32 %s54, 1
          %s246 = smul.addr %s245, 8
          %s247 = scalar_lea.vmem [#allocation3], %s246
          %s248 = smul.u32 2, %s30
          %250 = vsyncadd %s244, 0
          %s251 = smul.addr %s248, 2
          %s252 = sadd.s32 %s32, %s251
          %s253 = smul.addr %s252, 4
          %s254 = scalar_lea.hbm %s0, %s253
          %s255 = sshll.u32 %s254, 4
          %s256 = int_to_ptr.hbm [resolvable:$true] %s255
          %s257 = sshll.u32 %s247, 4
          %s258 = int_to_ptr.vmem [resolvable:$true] %s257
          %263 = dma.hbm_to_vmem [thread:$0]  %s256, 128, %s258, %s244, 128, 64, 4
        $region24: #{tpu_custom_call.1} parent=19 // pred_fallthru
          _
        // Predicated region
        $region25: #{tpu_custom_call.1} parent=19 // pred_check
          %p264 = pneg %p92
        $region26: #{tpu_custom_call.1} parent=19 // pred_check_branch
          %266 = sbr.rel (%p264) target = $region28
        $region27: #{tpu_custom_call.1} parent=19 // pred_region
          %s267 = sand.u32 %s23, 1
          %s268 = scalar_lea.sflag [#allocation7], %s267
          %s269 = sand.u32 %s82, 1
          %s270 = smul.addr %s269, 64
          %s271 = scalar_lea.vmem [#allocation6], %s270
          %s272 = smul.u32 16, %s32
          %274 = vsyncadd %s268, 0
          %s275 = smul.addr %s272, 2
          %s276 = sadd.s32 %s31, %s275
          %s277 = smul.addr %s276, 4
          %s278 = scalar_lea.hbm %s1, %s277
          %s279 = sshll.u32 %s278, 4
          %s280 = int_to_ptr.hbm [resolvable:$true] %s279
          %s281 = sshll.u32 %s271, 4
          %s282 = int_to_ptr.vmem [resolvable:$true] %s281
          %287 = dma.hbm_to_vmem [thread:$0]  %s280, 1024, %s282, %s268, 128, 64, 4
        $region28: #{tpu_custom_call.1} parent=19 // pred_fallthru
          _
        // Predicated region
        $region29: #{tpu_custom_call.1} parent=19 // pred_check
          %p288 = pneg %p144
        $region30: #{tpu_custom_call.1} parent=19 // pred_check_branch
          %290 = sbr.rel (%p288) target = $region32
        $region31: #{tpu_custom_call.1} parent=19 // pred_region
          %s291 = sand.u32 %s134, 1
          %s292 = scalar_lea.sflag [#allocation10], %s291
          %s293 = sand.u32 %s134, 1
          %s294 = smul.addr %s293, 64
          %s295 = scalar_lea.vmem [#allocation9], %s294
          %297 = vsyncadd %s292, 0
          %s298 = smul.addr %s31, 4
          %s299 = scalar_lea.hbm %s3, %s298
          %s300 = sshll.u32 %s299, 4
          %s301 = int_to_ptr.hbm [resolvable:$true] %s300
          %s302 = sshll.u32 %s295, 4
          %s303 = int_to_ptr.vmem [resolvable:$true] %s302
          %308 = dma.hbm_to_vmem [thread:$0]  %s301, 1024, %s303, %s292, 128, 64, 4
        $region32: #{tpu_custom_call.1} parent=19 // pred_fallthru
          _
        // Predicated region
        $region33: #{tpu_custom_call.1} parent=19 // pred_check
          %p309 = pneg %p170
        $region34: #{tpu_custom_call.1} parent=19 // pred_check_branch
          %311 = sbr.rel (%p309) target = $region36
        $region35: #{tpu_custom_call.1} parent=19 // pred_region
          %p312 = scmp.lt.s32.totalorder %s31, 1
          %s313 = scalar_select %p312, %s31, 1
          %s314 = scalar_lea.vmem %s4, %s313
        $region36: #{tpu_custom_call.1} parent=19 // pred_fallthru
          _
      $region20: #{tpu_custom_call.1} parent=5 // pred_fallthru
        _
      %p315 = scmp.le.s32.totalorder 1, %s23
      %p316 = scmp.lt.s32.totalorder %s23, 5
      %p317 = pnand %p315, %p316
      %p318 = pneg %p317
      // Predicated region
      $region37: #{tpu_custom_call.1} parent=5 // pred_check
        _
      $region38: #{tpu_custom_call.1} parent=5 // pred_check_branch
        %320 = sbr.rel (%p317) target = $region40
      $region39: #{tpu_custom_call.1} parent=5 // pred_region
        %s321 = ssub.s32 %s23, 1
        %s322 = sand.u32 %s57, 1
        %s323 = scalar_lea.sflag [#allocation4], %s322
        %s324 = sand.u32 %s57, 1
        %s325 = smul.addr %s324, 8
        %s326 = scalar_lea.vmem [#allocation3], %s325
        // Predicated region
        $region41: #{tpu_custom_call.1} parent=39 // pred_check
          %p327 = pneg %p70
        $region42: #{tpu_custom_call.1} parent=39 // pred_check_branch
          %329 = sbr.rel (%p327) target = $region44
        $region43: #{tpu_custom_call.1} parent=39 // pred_region
          %331 = dma.done %s323, 128
        $region44: #{tpu_custom_call.1} parent=39 // pred_fallthru
          _
        %s332 = sand.u32 %s28, 1
        %s333 = scalar_lea.sflag [#allocation7], %s332
        %s334 = sand.u32 %s85, 1
        %s335 = smul.addr %s334, 64
        %s336 = scalar_lea.vmem [#allocation6], %s335
        // Predicated region
        $region45: #{tpu_custom_call.1} parent=39 // pred_check
          %p337 = pneg %p98
        $region46: #{tpu_custom_call.1} parent=39 // pred_check_branch
          %339 = sbr.rel (%p337) target = $region48
        $region47: #{tpu_custom_call.1} parent=39 // pred_region
          %341 = dma.done %s333, 1024
        $region48: #{tpu_custom_call.1} parent=39 // pred_fallthru
          _
        // Predicated region
        $region49: #{tpu_custom_call.1} parent=39 // pred_check
          %p342 = pneg %p124
        $region50: #{tpu_custom_call.1} parent=39 // pred_check_branch
          %344 = sbr.rel (%p342) target = $region52
        $region51: #{tpu_custom_call.1} parent=39 // pred_region
          %346 = dma.done [#allocation7], 128
        $region52: #{tpu_custom_call.1} parent=39 // pred_fallthru
          _
        %s347 = sand.u32 %s137, 1
        %s348 = scalar_lea.sflag [#allocation10], %s347
        %s349 = sand.u32 %s137, 1
        %s350 = smul.addr %s349, 64
        %s351 = scalar_lea.vmem [#allocation9], %s350
        // Predicated region
        $region53: #{tpu_custom_call.1} parent=39 // pred_check
          %p352 = pneg %p150
        $region54: #{tpu_custom_call.1} parent=39 // pred_check_branch
          %354 = sbr.rel (%p352) target = $region56
        $region55: #{tpu_custom_call.1} parent=39 // pred_region
          %356 = dma.done %s348, 1024
        $region56: #{tpu_custom_call.1} parent=39 // pred_fallthru
          _
        %s357 = sand.u32 %s57, 1
        %s358 = scalar_lea.sflag [#allocation4], %s357
        %s359 = sand.u32 %s57, 1
        %s360 = smul.addr %s359, 8
        %s361 = scalar_lea.vmem [#allocation3], %s360
        %p362 = pneg %p70
        %p363 = pneg %p67
        %s364 = sand.u32 %s28, 1
        %s365 = scalar_lea.sflag [#allocation7], %s364
        %s366 = sand.u32 %s85, 1
        %s367 = smul.addr %s366, 64
        %s368 = scalar_lea.vmem [#allocation6], %s367
        %p369 = pneg %p98
        %p370 = pneg %p95
        %p371 = pneg %p124
        %p372 = pneg %p121
        %s373 = sand.u32 %s137, 1
        %s374 = scalar_lea.sflag [#allocation10], %s373
        %s375 = sand.u32 %s137, 1
        %s376 = smul.addr %s375, 64
        %s377 = scalar_lea.vmem [#allocation9], %s376
        %p378 = pneg %p150
        %p379 = pneg %p147
        %p380 = scmp.lt.s32.totalorder %s34, 1
        %s381 = scalar_select %p380, %s34, 1
        %s382 = scalar_lea.vmem %s4, %s381
        %p383 = pneg %p176
        %p384 = pneg %p173
        %p385 = pneg %p204
        %p386 = pneg %p201
        %s387 = sand.u32 %s191, 1
        %s388 = scalar_lea.sflag [#allocation5], %s387
        %s389 = sand.u32 %s191, 1
        %s390 = smul.addr %s389, 16
        %s391 = scalar_lea.vmem [#allocation11], %s390
        %s392 = smul.u32 2, %s33
        %s393 = smul.u32 16, %s35
        %s394 = smul.u32 2, %s33
        %p395 = scmp.lt.s32.totalorder %s34, 1
        %s396 = scalar_select %p395, %s34, 1
        %s397 = scalar_lea.vmem %s4, %s396
        %s398 = smul.u32 2, %s33
        %p399 = scmp.eq.s32.totalorder %s35, 0
        // Predicated region
        $region57: #{tpu_custom_call.1} parent=39 // pred_check
          %p400 = pneg %p399
        $region58: #{tpu_custom_call.1} parent=39 // pred_check_branch
          %402 = sbr.rel (%p400) target = $region60
        $region59: #{tpu_custom_call.1} parent=39 // pred_region
          %v403 = vld [vmem:[%s397] sm:$0x1]
          %v404 = vld [vmem:[#allocation8] sm:$0xf]
          %v405 = vld [vmem:[#allocation8 + $0x4] sm:$0xf]
          %v406 = vld [vmem:[%s351] sm:$0xf]
          %v407 = vld [vmem:[%s351 + $0x4] sm:$0xf]
          %v408 = vld [vmem:[%s351 + $0x8] sm:$0xf]
          %v409 = vld [vmem:[%s351 + $0xc] sm:$0xf]
          %v410 = vld [vmem:[%s351 + $0x10] sm:$0xf]
          %v411 = vld [vmem:[%s351 + $0x14] sm:$0xf]
          %v412 = vld [vmem:[%s351 + $0x18] sm:$0xf]
          %v413 = vld [vmem:[%s351 + $0x1c] sm:$0xf]
          %v414 = vld [vmem:[%s351 + $0x20] sm:$0xf]
          %v415 = vld [vmem:[%s351 + $0x24] sm:$0xf]
          %v416 = vld [vmem:[%s351 + $0x28] sm:$0xf]
          %v417 = vld [vmem:[%s351 + $0x2c] sm:$0xf]
          %v418 = vld [vmem:[%s351 + $0x30] sm:$0xf]
          %v419 = vld [vmem:[%s351 + $0x34] sm:$0xf]
          %v420 = vld [vmem:[%s351 + $0x38] sm:$0xf]
          %v421 = vld [vmem:[%s351 + $0x3c] sm:$0xf]
          %v424 = vunpack.c.l.b16 %v404
          %v425 = vunpack.c.l.b16 %v405
          %v426 = vpack.c.b16 %v425, %v424
          %v444 = vunpack.c.l.b16 %v406
          %v445 = vunpack.c.l.b16 %v407
          %v446 = vunpack.c.l.b16 %v408
          %v447 = vunpack.c.l.b16 %v409
          %v448 = vunpack.c.l.b16 %v410
          %v449 = vunpack.c.l.b16 %v411
          %v450 = vunpack.c.l.b16 %v412
          %v451 = vunpack.c.l.b16 %v413
          %v452 = vunpack.c.l.b16 %v414
          %v453 = vunpack.c.l.b16 %v415
          %v454 = vunpack.c.l.b16 %v416
          %v455 = vunpack.c.l.b16 %v417
          %v456 = vunpack.c.l.b16 %v418
          %v457 = vunpack.c.l.b16 %v419
          %v458 = vunpack.c.l.b16 %v420
          %v459 = vunpack.c.l.b16 %v421
          %v460 = vpack.c.b16 %v445, %v444
          %v461 = vpack.c.b16 %v447, %v446
          %v462 = vpack.c.b16 %v449, %v448
          %v463 = vpack.c.b16 %v451, %v450
          %v464 = vpack.c.b16 %v453, %v452
          %v465 = vpack.c.b16 %v455, %v454
          %v466 = vpack.c.b16 %v457, %v456
          %v467 = vpack.c.b16 %v459, %v458
          %476 = vmatpush.bf16.msra.mxu0 %v467
          %477 = vmatpush.bf16.msra.mxu0 %v466
          %478 = vmatpush.bf16.msra.mxu0 %v465
          %479 = vmatpush.bf16.msra.mxu0 %v464
          %480 = vmatpush.bf16.msra.mxu0 %v463
          %481 = vmatpush.bf16.msra.mxu0 %v462
          %482 = vmatpush.bf16.msra.mxu0 %v461
          %483 = vmatpush.bf16.msra.mxu0 %v460
          %484 = vmatmul.bf16.gmra.mxu0 %v426
          %v485 = vpop.f32.mrf.mxu0
          %v486 = vadd.f32 0.0, %v485
          %v487 = vpop.f32.mrf.mxu0
          %v488 = vadd.f32 0.0, %v487
          %489 = vdwg.mxu0
          %v491 = vperm.slane %v403, 0
          %v493 = vadd.f32 %v491, %v486
          %v494 = vadd.f32 %v491, %v488
          %495 = vst [vmem:[#allocation2] sm:$0xff] %v493
          %496 = vst [vmem:[#allocation2 + $0x8] sm:$0xff] %v494
        $region60: #{tpu_custom_call.1} parent=39 // pred_fallthru
          _
        %v497 = vld [vmem:[#allocation2] sm:$0xff]
        %v498 = vld [vmem:[#allocation2 + $0x8] sm:$0xff]
        %v499 = vld [vmem:[%s326] sm:$0xf]
        %v500 = vld [vmem:[%s326 + $0x4] sm:$0xf]
        %v501 = vld [vmem:[%s336] sm:$0xf]
        %v502 = vld [vmem:[%s336 + $0x4] sm:$0xf]
        %v503 = vld [vmem:[%s336 + $0x8] sm:$0xf]
        %v504 = vld [vmem:[%s336 + $0xc] sm:$0xf]
        %v505 = vld [vmem:[%s336 + $0x10] sm:$0xf]
        %v506 = vld [vmem:[%s336 + $0x14] sm:$0xf]
        %v507 = vld [vmem:[%s336 + $0x18] sm:$0xf]
        %v508 = vld [vmem:[%s336 + $0x1c] sm:$0xf]
        %v509 = vld [vmem:[%s336 + $0x20] sm:$0xf]
        %v510 = vld [vmem:[%s336 + $0x24] sm:$0xf]
        %v511 = vld [vmem:[%s336 + $0x28] sm:$0xf]
        %v512 = vld [vmem:[%s336 + $0x2c] sm:$0xf]
        %v513 = vld [vmem:[%s336 + $0x30] sm:$0xf]
        %v514 = vld [vmem:[%s336 + $0x34] sm:$0xf]
        %v515 = vld [vmem:[%s336 + $0x38] sm:$0xf]
        %v516 = vld [vmem:[%s336 + $0x3c] sm:$0xf]
        %v519 = vunpack.c.l.b16 %v499
        %v520 = vunpack.c.l.b16 %v500
        %v521 = vpack.c.b16 %v520, %v519
        %v539 = vunpack.c.l.b16 %v501
        %v540 = vunpack.c.l.b16 %v502
        %v541 = vunpack.c.l.b16 %v503
        %v542 = vunpack.c.l.b16 %v504
        %v543 = vunpack.c.l.b16 %v505
        %v544 = vunpack.c.l.b16 %v506
        %v545 = vunpack.c.l.b16 %v507
        %v546 = vunpack.c.l.b16 %v508
        %v547 = vunpack.c.l.b16 %v509
        %v548 = vunpack.c.l.b16 %v510
        %v549 = vunpack.c.l.b16 %v511
        %v550 = vunpack.c.l.b16 %v512
        %v551 = vunpack.c.l.b16 %v513
        %v552 = vunpack.c.l.b16 %v514
        %v553 = vunpack.c.l.b16 %v515
        %v554 = vunpack.c.l.b16 %v516
        %v555 = vpack.c.b16 %v540, %v539
        %v556 = vpack.c.b16 %v542, %v541
        %v557 = vpack.c.b16 %v544, %v543
        %v558 = vpack.c.b16 %v546, %v545
        %v559 = vpack.c.b16 %v548, %v547
        %v560 = vpack.c.b16 %v550, %v549
        %v561 = vpack.c.b16 %v552, %v551
        %v562 = vpack.c.b16 %v554, %v553
        %571 = vmatpush.bf16.msra.mxu0 %v562
        %572 = vmatpush.bf16.msra.mxu0 %v561
        %573 = vmatpush.bf16.msra.mxu0 %v560
        %574 = vmatpush.bf16.msra.mxu0 %v559
        %575 = vmatpush.bf16.msra.mxu0 %v558
        %576 = vmatpush.bf16.msra.mxu0 %v557
        %577 = vmatpush.bf16.msra.mxu0 %v556
        %578 = vmatpush.bf16.msra.mxu0 %v555
        %579 = vmatmul.bf16.gmra.mxu0 %v521
        %v580 = vpop.f32.mrf.mxu0
        %v581 = vadd.f32 0.0, %v580
        %v582 = vpop.f32.mrf.mxu0
        %v583 = vadd.f32 0.0, %v582
        %584 = vdwg.mxu0
        %v585 = vadd.f32 %v497, %v581
        %v586 = vadd.f32 %v498, %v583
        %587 = vst [vmem:[#allocation2] sm:$0xff] %v585
        %588 = vst [vmem:[#allocation2 + $0x8] sm:$0xff] %v586
        %p589 = scmp.eq.s32.totalorder %s35, 1
        // Predicated region
        $region61: #{tpu_custom_call.1} parent=39 // pred_check
          %p590 = pneg %p589
        $region62: #{tpu_custom_call.1} parent=39 // pred_check_branch
          %592 = sbr.rel (%p590) target = $region64
        $region63: #{tpu_custom_call.1} parent=39 // pred_region
          %v593 = vld [vmem:[#allocation2] sm:$0xff]
          %v594 = vld [vmem:[#allocation2 + $0x8] sm:$0xff]
          %595 = vst [vmem:[%s391] sm:$0xff] %v593
          %596 = vst [vmem:[%s391 + $0x8] sm:$0xff] %v594
        $region64: #{tpu_custom_call.1} parent=39 // pred_fallthru
          _
        %s597 = sand.u32 %s191, 1
        %s598 = scalar_lea.sflag [#allocation5], %s597
        %s599 = sand.u32 %s191, 1
        %s600 = smul.addr %s599, 16
        %s601 = scalar_lea.vmem [#allocation11], %s600
        // Predicated region
        $region65: #{tpu_custom_call.1} parent=39 // pred_check
          %p602 = pneg %p201
        $region66: #{tpu_custom_call.1} parent=39 // pred_check_branch
          %604 = sbr.rel (%p602) target = $region68
        $region67: #{tpu_custom_call.1} parent=39 // pred_region
          %s605 = smul.u32 2, %s33
          %607 = vsyncadd %s598, 0
          %s608 = smul.addr %s605, 2
          %s609 = sadd.s32 %s34, %s608
          %s610 = smul.addr %s609, 8
          %s611 = scalar_lea.hbm %s5, %s610
          %s612 = sshll.u32 %s601, 4
          %s613 = int_to_ptr.vmem [resolvable:$true] %s612
          %s614 = sshll.u32 %s611, 4
          %s615 = int_to_ptr.hbm [resolvable:$true] %s614
          %620 = dma.vmem_to_hbm [thread:$0]  %s613, 256, %s615, %s598, 128, 256, 8
        $region68: #{tpu_custom_call.1} parent=39 // pred_fallthru
          _
      $region40: #{tpu_custom_call.1} parent=5 // pred_fallthru
        _
      %p621 = scmp.le.s32.totalorder 2, %s23
      // Predicated region
      $region69: #{tpu_custom_call.1} parent=5 // pred_check
        %p622 = pneg %p621
      $region70: #{tpu_custom_call.1} parent=5 // pred_check_branch
        %624 = sbr.rel (%p622) target = $region72
      $region71: #{tpu_custom_call.1} parent=5 // pred_region
        %s625 = ssub.s32 %s23, 2
        // Predicated region
        $region73: #{tpu_custom_call.1} parent=71 // pred_check
          %p626 = pneg %p207
        $region74: #{tpu_custom_call.1} parent=71 // pred_check_branch
          %628 = sbr.rel (%p626) target = $region76
        $region75: #{tpu_custom_call.1} parent=71 // pred_region
          %s629 = sand.u32 %s192, 1
          %s630 = scalar_lea.sflag [#allocation5], %s629
          %s631 = sand.u32 %s192, 1
          %s632 = smul.addr %s631, 16
          %s633 = scalar_lea.vmem [#allocation11], %s632
          %635 = dma.done %s630, 256
        $region76: #{tpu_custom_call.1} parent=71 // pred_fallthru
          _
      $region72: #{tpu_custom_call.1} parent=5 // pred_fallthru
        _
    $region6: #{tpu_custom_call.1} parent=1 // loop_footer
      %s27 = sadd.s32 1, %s23
    $region7: #{tpu_custom_call.1} parent=1 // loop_footer_branch
      %22 = sbr.rel target = $region3
    $region8: #{tpu_custom_call.1} parent=1 // loop_exit
      _
    %636 = vsyncpa [#allocation4], 1
    %s637 = scalar_lea.sflag [#allocation4], 1
    %638 = vsyncpa %s637, 1
    %639 = vsyncpa [#allocation7], 1
    %s640 = scalar_lea.sflag [#allocation7], 1
    %641 = vsyncpa %s640, 1
    %642 = vsyncpa [#allocation10], 1
    %s643 = scalar_lea.sflag [#allocation10], 1
    %644 = vsyncpa %s643, 1
    %645 = vsyncpa [#allocation5], 1
    %s646 = scalar_lea.sflag [#allocation5], 1
    %647 = vsyncpa %s646, 1

</llo_original>
